<compile_context>
chip_gen: v5e
topology: v5e:2x2
jax: 0.10.0
libtpu: 0.0.40
codegen_flags: <defaults>
</compile_context>

<pallas_src>
import functools

import jax
import jax.numpy as jnp
from jax.experimental import pallas as pl
from jax.experimental.pallas import tpu as pltpu

_LANE = 128
_SUBLANE = 8


def _round_up(n, m):
    return (n + m - 1) // m * m


def _generator_kernel(x_ref, wf_ref, bf_ref, w4_ref, b4_ref, o_ref):
    """Fused folded MLP: (x @ Wf + bf) -> LeakyReLU(0.1) -> (@ W4 + b4)."""
    x = x_ref[...]                                     # bf16 (bt, in_pad)

    # Folded affine stack (layers 1-3), f32 accumulation on the MXU.
    h = jnp.dot(x, wf_ref[...], preferred_element_type=jnp.float32)
    h = h + bf_ref[...]                                # f32 bias, row-broadcast

    # LeakyReLU(negative_slope=0.1): slope in (0,1) => max(h, 0.1*h).
    h = jnp.maximum(h, 0.1 * h)

    # Final Linear, bf16 inputs / f32 accumulation.
    out = jnp.dot(h.astype(jnp.bfloat16), w4_ref[...],
                  preferred_element_type=jnp.float32)
    out = out + b4_ref[...]
    o_ref[...] = out.astype(o_ref.dtype)


def generator_forward(x, params, *, batch_tile=None):
    """Run the fused Generator forward pass.

    x:      (B, input_size) float32
    params: dict with w1..w4 stored as (in_dim, out_dim) and b1..b4 as (1, out_dim)
    """
    B, in_dim = x.shape
    w1, b1 = params["w1"], params["b1"]
    w2, b2 = params["w2"], params["b2"]
    w3, b3 = params["w3"], params["b3"]
    w4, b4 = params["w4"], params["b4"]
    hid = w4.shape[0]
    out_dim = w4.shape[1]

    # ---- Fold Linear(in,hid) -> Linear(hid,128) -> Linear(128,hid) (no
    # nonlinearity between them) into one affine map, in f32, at trace time. ----
    wf = (w1 @ w2) @ w3                              # (in_dim, hid)
    bf = (b1 @ w2 + b2) @ w3 + b3                    # (1, hid)

    # ---- Pad feature dims to lane width; cast matmul operands to bf16. ----
    in_pad = _round_up(in_dim, _LANE)
    hid_pad = _round_up(hid, _LANE)
    out_pad = _round_up(out_dim, _LANE)

    wf_p = jnp.pad(wf, ((0, in_pad - in_dim), (0, hid_pad - hid))).astype(jnp.bfloat16)
    bf_p = jnp.pad(bf, ((0, 0), (0, hid_pad - hid))).astype(jnp.float32)
    w4_p = jnp.pad(w4, ((0, hid_pad - hid), (0, out_pad - out_dim))).astype(jnp.bfloat16)
    b4_p = jnp.pad(b4, ((0, 0), (0, out_pad - out_dim))).astype(jnp.float32)

    # ---- Batch tiling: pipeline DMAs, stay well inside v7x's 64 MiB VMEM,
    # and prefer >=2 grid steps so the batch axis shards across v7x's 2 TCs. ----
    if batch_tile is None:
        batch_tile = min(max(B, _SUBLANE), 2048)
    batch_tile = max(_SUBLANE, _round_up(batch_tile, _SUBLANE))
    half = _round_up(pl.cdiv(B, 2), _SUBLANE)
    batch_tile = min(batch_tile, max(_SUBLANE, half))

    b_pad = _round_up(max(B, batch_tile), batch_tile)
    x_p = jnp.pad(x, ((0, b_pad - B), (0, in_pad - in_dim))).astype(jnp.bfloat16)

    grid = (b_pad // batch_tile,)

    def whole(shape):
        return pl.BlockSpec(shape, lambda i: (0,) * len(shape))

    out_padded = pl.pallas_call(
        _generator_kernel,
        out_shape=jax.ShapeDtypeStruct((b_pad, out_pad), jnp.float32),
        grid_spec=pltpu.PrefetchScalarGridSpec(
            num_scalar_prefetch=0,
            grid=grid,
            in_specs=[
                pl.BlockSpec((batch_tile, in_pad), lambda i: (i, 0)),
                whole(wf_p.shape), whole(bf_p.shape),
                whole(w4_p.shape), whole(b4_p.shape),
            ],
            out_specs=pl.BlockSpec((batch_tile, out_pad), lambda i: (i, 0)),
        ),
        compiler_params=pltpu.CompilerParams(
            dimension_semantics=("parallel",)),
    )(x_p, wf_p, bf_p, w4_p, b4_p)

    return out_padded[:B, :out_dim].astype(x.dtype)


def init_generator_params(key, input_size, hidden_size, output_size,
                          dtype=jnp.float32):
    """Deterministic init mimicking PyTorch nn.Linear defaults
    (uniform +/- 1/sqrt(fan_in)). Weights stored as (in_dim, out_dim)."""
    dims = [(input_size, hidden_size),
            (hidden_size, 128),
            (128, hidden_size),
            (hidden_size, output_size)]
    params = {}
    for idx, (fan_in, fan_out) in enumerate(dims, start=1):
        key, kw, kb = jax.random.split(key, 3)
        bound = 1.0 / jnp.sqrt(jnp.asarray(fan_in, dtype))
        params[f"w{idx}"] = jax.random.uniform(
            kw, (fan_in, fan_out), dtype, minval=-bound, maxval=bound)
        params[f"b{idx}"] = jax.random.uniform(
            kb, (1, fan_out), dtype, minval=-bound, maxval=bound)
    return params


def _reference_forward(x, params):
    """Pure-JAX f32 reference of the original (unfolded) forward pass."""
    h = x @ params["w1"] + params["b1"]
    h = h @ params["w2"] + params["b2"]
    h = h @ params["w3"] + params["b3"]
    h = jnp.where(h >= 0, h, 0.1 * h)
    return h @ params["w4"] + params["b4"]


if __name__ == "__main__":
    # Small shapes consistent with the module's forward: gen_data is (B, input_size).
    batch = 8
    input_size = 16
    hidden_size = 32
    output_size = 16

    key = jax.random.PRNGKey(0)
    key, kx = jax.random.split(key)
    x = jax.random.normal(kx, (batch, input_size), dtype=jnp.float32)

    params = init_generator_params(key, input_size, hidden_size, output_size)

    fwd = jax.jit(generator_forward)
    out = fwd(x, params)
    out = jax.block_until_ready(out)

    ref = _reference_forward(x, params)
    assert out.shape == (batch, output_size)
    # bf16 matmul inputs (f32 accumulation) => loose-but-tight-enough tolerance.
    assert jnp.allclose(out, ref, atol=3e-2, rtol=3e-2)

    print("KERNEL_OK")
</pallas_src>

<mosaic_0001>
module attributes {stable_mosaic.version = 11 : i64} {
  func.func @_generator_kernel(%arg0: i32, %arg1: memref<8x128xbf16, #tpu.memory_space<vmem>>, %arg2: memref<128x128xbf16, #tpu.memory_space<vmem>>, %arg3: memref<1x128xf32, #tpu.memory_space<vmem>>, %arg4: memref<128x128xbf16, #tpu.memory_space<vmem>>, %arg5: memref<1x128xf32, #tpu.memory_space<vmem>>, %arg6: memref<8x128xf32, #tpu.memory_space<vmem>>) attributes {dimension_semantics = [#tpu.dimension_semantics<parallel>], iteration_bounds = array<i64: 1>, scalar_prefetch = 0 : i64, scratch_operands = 0 : i64, tpu.core_type = #tpu.core_type<tc>, window_params = [{transform_indices = @transform_0, window_bounds = array<i64: 8, 128>}, {pipeline_mode = #tpu.pipeline_mode<synchronous>, transform_indices = @transform_1, window_bounds = array<i64: 128, 128>}, {pipeline_mode = #tpu.pipeline_mode<synchronous>, transform_indices = @transform_2, window_bounds = array<i64: 1, 128>}, {pipeline_mode = #tpu.pipeline_mode<synchronous>, transform_indices = @transform_3, window_bounds = array<i64: 128, 128>}, {pipeline_mode = #tpu.pipeline_mode<synchronous>, transform_indices = @transform_4, window_bounds = array<i64: 1, 128>}, {transform_indices = @transform_5, window_bounds = array<i64: 8, 128>}]} {
    %c0 = arith.constant 0 : index
    %c0_0 = arith.constant 0 : index
    %0 = vector.load %arg1[%c0, %c0_0] : memref<8x128xbf16, #tpu.memory_space<vmem>>, vector<8x128xbf16>
    %c0_1 = arith.constant 0 : index
    %c0_2 = arith.constant 0 : index
    %1 = vector.load %arg2[%c0_1, %c0_2] : memref<128x128xbf16, #tpu.memory_space<vmem>>, vector<128x128xbf16>
    %cst = arith.constant dense<0.000000e+00> : vector<8x128xf32>
    %2 = tpu.matmul %0, %1, %cst {dimension_numbers = #tpu.dot_dimension_numbers<[1], [0], [0], [1], [0, 0, 1, 1], [], []>} : vector<8x128xbf16>, vector<128x128xbf16>, vector<8x128xf32> -> vector<8x128xf32>
    %c0_3 = arith.constant 0 : index
    %c0_4 = arith.constant 0 : index
    %3 = vector.load %arg3[%c0_3, %c0_4] : memref<1x128xf32, #tpu.memory_space<vmem>>, vector<1x128xf32>
    %4 = vector.broadcast %3 : vector<1x128xf32> to vector<8x128xf32>
    %5 = arith.addf %2, %4 : vector<8x128xf32>
    %cst_5 = arith.constant 1.000000e-01 : f32
    %6 = vector.broadcast %cst_5 : f32 to vector<8x128xf32>
    %7 = arith.mulf %6, %5 : vector<8x128xf32>
    %8 = arith.maximumf %5, %7 : vector<8x128xf32>
    %9 = arith.truncf %8 : vector<8x128xf32> to vector<8x128xbf16>
    %c0_6 = arith.constant 0 : index
    %c0_7 = arith.constant 0 : index
    %10 = vector.load %arg4[%c0_6, %c0_7] : memref<128x128xbf16, #tpu.memory_space<vmem>>, vector<128x128xbf16>
    %cst_8 = arith.constant dense<0.000000e+00> : vector<8x128xf32>
    %11 = tpu.matmul %9, %10, %cst_8 {dimension_numbers = #tpu.dot_dimension_numbers<[1], [0], [0], [1], [0, 0, 1, 1], [], []>} : vector<8x128xbf16>, vector<128x128xbf16>, vector<8x128xf32> -> vector<8x128xf32>
    %c0_9 = arith.constant 0 : index
    %c0_10 = arith.constant 0 : index
    %12 = vector.load %arg5[%c0_9, %c0_10] : memref<1x128xf32, #tpu.memory_space<vmem>>, vector<1x128xf32>
    %13 = vector.broadcast %12 : vector<1x128xf32> to vector<8x128xf32>
    %14 = arith.addf %11, %13 : vector<8x128xf32>
    %c0_11 = arith.constant 0 : index
    %c0_12 = arith.constant 0 : index
    %15 = vector.load %arg6[%c0_11, %c0_12] : memref<8x128xf32, #tpu.memory_space<vmem>>, vector<8x128xf32>
    tpu.vector_store %arg6[%c0_11, %c0_12], %14 {strides = array<i32>} : memref<8x128xf32, #tpu.memory_space<vmem>>, vector<8x128xf32>,
    return
  }
  func.func @transform_0(%arg0: i32) -> (i32, i32) {
    %c0_i32 = arith.constant 0 : i32
    %c0_i32_0 = arith.constant 0 : i32
    return %arg0, %c0_i32 : i32, i32
  }
  func.func @transform_1(%arg0: i32) -> (i32, i32) {
    %c0_i32 = arith.constant 0 : i32
    %c0_i32_0 = arith.constant 0 : i32
    %c0_i32_1 = arith.constant 0 : i32
    return %c0_i32, %c0_i32_0 : i32, i32
  }
  func.func @transform_2(%arg0: i32) -> (i32, i32) {
    %c0_i32 = arith.constant 0 : i32
    %c0_i32_0 = arith.constant 0 : i32
    %c0_i32_1 = arith.constant 0 : i32
    return %c0_i32, %c0_i32_0 : i32, i32
  }
  func.func @transform_3(%arg0: i32) -> (i32, i32) {
    %c0_i32 = arith.constant 0 : i32
    %c0_i32_0 = arith.constant 0 : i32
    %c0_i32_1 = arith.constant 0 : i32
    return %c0_i32, %c0_i32_0 : i32, i32
  }
  func.func @transform_4(%arg0: i32) -> (i32, i32) {
    %c0_i32 = arith.constant 0 : i32
    %c0_i32_0 = arith.constant 0 : i32
    %c0_i32_1 = arith.constant 0 : i32
    return %c0_i32, %c0_i32_0 : i32, i32
  }
  func.func @transform_5(%arg0: i32) -> (i32, i32) {
    %c0_i32 = arith.constant 0 : i32
    %c0_i32_0 = arith.constant 0 : i32
    return %arg0, %c0_i32 : i32, i32
  }
}

</mosaic_0001>

<llo_original>
// kernel: generator_forward.1
$region0: #{generator_forward.1}
  #allocation0 [shape = 'u32[]', space=smem, size = 0x4, offset = 0x4, fixed_abs, tag = 'smem constant byte address 0x4 - core index']
  #allocation1 [shape = 'u32[72,128]{1,0:T(1,128)}', space=vmem, size = 0x9000, scoped, tag = 'internal scratch']
  %s0 = inlined_call_operand.vmem [shape: bf16[8,128], index: 0, kind: input, shape index: {}]
  %s1 = inlined_call_operand.vmem [shape: bf16[128,128], index: 1, kind: input, shape index: {}]
  %s2 = inlined_call_operand.vmem [shape: f32[1,128], index: 2, kind: input, shape index: {}]
  %s3 = inlined_call_operand.vmem [shape: bf16[128,128], index: 3, kind: input, shape index: {}]
  %s4 = inlined_call_operand.vmem [shape: f32[1,128], index: 4, kind: input, shape index: {}]
  %s5 = inlined_call_operand.hbm [shape: f32[8,128], index: 5, kind: output, shape index: {}]
  %s6 = sld [smem:[#allocation0]]
  $region30: #{generator_forward.1} parent=0
    _
  %s8 = ssub.s32 1, %s6
  %s9 = scalar_select 0, %s8, %s6
  $region1: #{generator_forward.1} parent=0
    #allocation2 [shape = 'u8[4096]{0}', space=vmem, size = 0x1000, scoped, tag = 'output window, operand 0, single buffered']
    #allocation3 [shape = 's32[1]{0}', space=sflag, size = 0x4, scoped, tag = 'scoped memory for generator_forward.1']
    %10 = vsyncpa [#allocation3], 0
    // Predicated region
    $region2: #{generator_forward.1} parent=1 // pred_check
      _
    $region3: #{generator_forward.1} parent=1 // pred_check_branch
      %12 = sbr.rel (0) target = $region5
    $region4: #{generator_forward.1} parent=1 // pred_region
      _
    $region5: #{generator_forward.1} parent=1 // pred_fallthru
      _
    // Predicated region
    $region6: #{generator_forward.1} parent=1 // pred_check
      _
    $region7: #{generator_forward.1} parent=1 // pred_check_branch
      %14 = sbr.rel (0) target = $region9
    $region8: #{generator_forward.1} parent=1 // pred_region
      _
    $region9: #{generator_forward.1} parent=1 // pred_fallthru
      _
    // Predicated region
    $region10: #{generator_forward.1} parent=1 // pred_check
      _
    $region11: #{generator_forward.1} parent=1 // pred_check_branch
      %16 = sbr.rel (0) target = $region13
    $region12: #{generator_forward.1} parent=1 // pred_region
      _
    $region13: #{generator_forward.1} parent=1 // pred_fallthru
      _
    // Predicated region
    $region14: #{generator_forward.1} parent=1 // pred_check
      _
    $region15: #{generator_forward.1} parent=1 // pred_check_branch
      %18 = sbr.rel (0) target = $region17
    $region16: #{generator_forward.1} parent=1 // pred_region
      _
    $region17: #{generator_forward.1} parent=1 // pred_fallthru
      _
    // Predicated region
    $region18: #{generator_forward.1} parent=1 // pred_check
      _
    $region19: #{generator_forward.1} parent=1 // pred_check_branch
      %20 = sbr.rel (0) target = $region21
    $region20: #{generator_forward.1} parent=1 // pred_region
      _
    $region21: #{generator_forward.1} parent=1 // pred_fallthru
      _
    %v21 = vld [vmem:[%s0] sm:$0xf]
    %v22 = vld [vmem:[%s1] sm:$0xf]
    %v23 = vld [vmem:[%s1 + $0x4] sm:$0xf]
    %v24 = vld [vmem:[%s1 + $0x8] sm:$0xf]
    %v25 = vld [vmem:[%s1 + $0xc] sm:$0xf]
    %v26 = vld [vmem:[%s1 + $0x10] sm:$0xf]
    %v27 = vld [vmem:[%s1 + $0x14] sm:$0xf]
    %v28 = vld [vmem:[%s1 + $0x18] sm:$0xf]
    %v29 = vld [vmem:[%s1 + $0x1c] sm:$0xf]
    %v30 = vld [vmem:[%s1 + $0x20] sm:$0xf]
    %v31 = vld [vmem:[%s1 + $0x24] sm:$0xf]
    %v32 = vld [vmem:[%s1 + $0x28] sm:$0xf]
    %v33 = vld [vmem:[%s1 + $0x2c] sm:$0xf]
    %v34 = vld [vmem:[%s1 + $0x30] sm:$0xf]
    %v35 = vld [vmem:[%s1 + $0x34] sm:$0xf]
    %v36 = vld [vmem:[%s1 + $0x38] sm:$0xf]
    %v37 = vld [vmem:[%s1 + $0x3c] sm:$0xf]
    %v38 = vld [vmem:[%s2] sm:$0x1]
    %v40 = vperm.slane %v38, 0
    %v58 = vunpack.c.l.b16 %v22
    %v59 = vunpack.c.l.b16 %v23
    %v60 = vunpack.c.l.b16 %v24
    %v61 = vunpack.c.l.b16 %v25
    %v62 = vunpack.c.l.b16 %v26
    %v63 = vunpack.c.l.b16 %v27
    %v64 = vunpack.c.l.b16 %v28
    %v65 = vunpack.c.l.b16 %v29
    %v66 = vunpack.c.l.b16 %v30
    %v67 = vunpack.c.l.b16 %v31
    %v68 = vunpack.c.l.b16 %v32
    %v69 = vunpack.c.l.b16 %v33
    %v70 = vunpack.c.l.b16 %v34
    %v71 = vunpack.c.l.b16 %v35
    %v72 = vunpack.c.l.b16 %v36
    %v73 = vunpack.c.l.b16 %v37
    %v74 = vpack.c.b16 %v59, %v58
    %v75 = vpack.c.b16 %v61, %v60
    %v76 = vpack.c.b16 %v63, %v62
    %v77 = vpack.c.b16 %v65, %v64
    %v78 = vpack.c.b16 %v67, %v66
    %v79 = vpack.c.b16 %v69, %v68
    %v80 = vpack.c.b16 %v71, %v70
    %v81 = vpack.c.b16 %v73, %v72
    %90 = vmatpush.bf16.msra.mxu0 %v81
    %91 = vmatpush.bf16.msra.mxu0 %v80
    %92 = vmatpush.bf16.msra.mxu0 %v79
    %93 = vmatpush.bf16.msra.mxu0 %v78
    %94 = vmatpush.bf16.msra.mxu0 %v77
    %95 = vmatpush.bf16.msra.mxu0 %v76
    %96 = vmatpush.bf16.msra.mxu0 %v75
    %97 = vmatpush.bf16.msra.mxu0 %v74
    %98 = vmatmul.bf16.gmra.mxu0 %v21
    %v99 = vpop.f32.mrf.mxu0
    %v100 = vadd.f32 %v40, %v99
    %v101 = vpop.f32.mrf.mxu0
    %102 = vdwg.mxu0
    %v103 = vmul.f32 %v100, 0.1
    %v104 = vmax.f32 %v100, %v103
    %v105 = vpack.c.bf16 %v104, %v104
    %v106 = vld [vmem:[%s3] sm:$0xf]
    %v107 = vld [vmem:[%s3 + $0x4] sm:$0xf]
    %v108 = vld [vmem:[%s3 + $0x8] sm:$0xf]
    %v109 = vld [vmem:[%s3 + $0xc] sm:$0xf]
    %v110 = vld [vmem:[%s3 + $0x10] sm:$0xf]
    %v111 = vld [vmem:[%s3 + $0x14] sm:$0xf]
    %v112 = vld [vmem:[%s3 + $0x18] sm:$0xf]
    %v113 = vld [vmem:[%s3 + $0x1c] sm:$0xf]
    %v114 = vld [vmem:[%s3 + $0x20] sm:$0xf]
    %v115 = vld [vmem:[%s3 + $0x24] sm:$0xf]
    %v116 = vld [vmem:[%s3 + $0x28] sm:$0xf]
    %v117 = vld [vmem:[%s3 + $0x2c] sm:$0xf]
    %v118 = vld [vmem:[%s3 + $0x30] sm:$0xf]
    %v119 = vld [vmem:[%s3 + $0x34] sm:$0xf]
    %v120 = vld [vmem:[%s3 + $0x38] sm:$0xf]
    %v121 = vld [vmem:[%s3 + $0x3c] sm:$0xf]
    %v122 = vld [vmem:[%s4] sm:$0x1]
    %v124 = vperm.slane %v122, 0
    %v142 = vunpack.c.l.b16 %v106
    %v143 = vunpack.c.l.b16 %v107
    %v144 = vunpack.c.l.b16 %v108
    %v145 = vunpack.c.l.b16 %v109
    %v146 = vunpack.c.l.b16 %v110
    %v147 = vunpack.c.l.b16 %v111
    %v148 = vunpack.c.l.b16 %v112
    %v149 = vunpack.c.l.b16 %v113
    %v150 = vunpack.c.l.b16 %v114
    %v151 = vunpack.c.l.b16 %v115
    %v152 = vunpack.c.l.b16 %v116
    %v153 = vunpack.c.l.b16 %v117
    %v154 = vunpack.c.l.b16 %v118
    %v155 = vunpack.c.l.b16 %v119
    %v156 = vunpack.c.l.b16 %v120
    %v157 = vunpack.c.l.b16 %v121
    %v158 = vpack.c.b16 %v143, %v142
    %v159 = vpack.c.b16 %v145, %v144
    %v160 = vpack.c.b16 %v147, %v146
    %v161 = vpack.c.b16 %v149, %v148
    %v162 = vpack.c.b16 %v151, %v150
    %v163 = vpack.c.b16 %v153, %v152
    %v164 = vpack.c.b16 %v155, %v154
    %v165 = vpack.c.b16 %v157, %v156
    %174 = vmatpush.bf16.msra.mxu0 %v165
    %175 = vmatpush.bf16.msra.mxu0 %v164
    %176 = vmatpush.bf16.msra.mxu0 %v163
    %177 = vmatpush.bf16.msra.mxu0 %v162
    %178 = vmatpush.bf16.msra.mxu0 %v161
    %179 = vmatpush.bf16.msra.mxu0 %v160
    %180 = vmatpush.bf16.msra.mxu0 %v159
    %181 = vmatpush.bf16.msra.mxu0 %v158
    %182 = vmatmul.bf16.gmra.mxu0 %v105
    %v183 = vpop.f32.mrf.mxu0
    %v184 = vadd.f32 %v124, %v183
    %v185 = vpop.f32.mrf.mxu0
    %186 = vdwg.mxu0
    %187 = vst [vmem:[#allocation2] sm:$0xff] %v184
    // Predicated region
    $region22: #{generator_forward.1} parent=1 // pred_check
      _
    $region23: #{generator_forward.1} parent=1 // pred_check_branch
      %189 = sbr.rel (0) target = $region25
    $region24: #{generator_forward.1} parent=1 // pred_region
      %191 = vsyncadd [#allocation3], 0
      %s193 = sshll.u32 [#allocation2], 4
      %s194 = int_to_ptr.vmem [resolvable:$true] %s193
      %s195 = sshll.u32 %s5, 4
      %s196 = int_to_ptr.hbm [resolvable:$true] %s195
      %198 = dma.vmem_to_hbm [thread:$0]  %s194, 128, %s196, [#allocation3]
    $region25: #{generator_forward.1} parent=1 // pred_fallthru
      _
    // Predicated region
    $region26: #{generator_forward.1} parent=1 // pred_check
      _
    $region27: #{generator_forward.1} parent=1 // pred_check_branch
      %200 = sbr.rel (0) target = $region29
    $region28: #{generator_forward.1} parent=1 // pred_region
      %202 = dma.done [#allocation3], 128
    $region29: #{generator_forward.1} parent=1 // pred_fallthru
      _
    %203 = vsyncpa [#allocation3], 1

</llo_original>
